<compile_context>
chip_gen: v7x
topology: tpu7x:2x2x1
jax: 0.10.0
libtpu: 0.0.40
codegen_flags: <defaults>
</compile_context>

<pallas_src>
import functools

import jax
import jax.numpy as jnp
from jax.experimental import pallas as pl
from jax.experimental.pallas import tpu as pltpu


def _round_up(x: int, m: int) -> int:
    return ((x + m - 1) // m) * m


def _linear_kernel(x_ref, w_ref, b_ref, o_ref, acc_ref):
    k = pl.program_id(2)

    @pl.when(k == 0)
    def _():
        acc_ref[...] = jnp.zeros_like(acc_ref)

    # MXU matmul, f32 accumulation. (Optionally cast x/w to bf16 here on
    # v6e/v7x for ~2x bandwidth if the model tolerates reduced precision.)
    acc_ref[...] += jnp.dot(
        x_ref[...], w_ref[...], preferred_element_type=jnp.float32
    )

    @pl.when(k == pl.num_programs(2) - 1)
    def _():
        # Bias add + store only once per output tile.
        o_ref[...] = (acc_ref[...] + b_ref[...]).astype(o_ref.dtype)


@functools.partial(jax.jit, static_argnames=("tm", "tn", "tk"))
def linear_forward(x, w_t, b, *, tm=256, tn=256, tk=512):
    """y = x @ w_t + b via a tiled (M, N, K) Pallas matmul.

    x:   (B, in_features)              float32
    w_t: (in_features, out_features)   float32 (transposed PyTorch weight)
    b:   (1, out_features)             float32
    """
    B, K = x.shape
    N = w_t.shape[1]

    # Clamp tiles to the padded problem size; keep TPU-native granularity
    # (sublane multiple of 8 for M, lane multiple of 128 for N and K).
    tm = min(tm, _round_up(B, 8))
    tk = min(tk, _round_up(K, 128))
    tn = min(tn, _round_up(N, 128))

    Bp = _round_up(B, tm)
    Kp = _round_up(K, tk)
    Np = _round_up(N, tn)

    # Zero-pad so every block is full; zeros along K contribute nothing to the
    # accumulation and padded rows/cols are sliced off below.
    xp = jnp.pad(x, ((0, Bp - B), (0, Kp - K)))
    wp = jnp.pad(w_t, ((0, Kp - K), (0, Np - N)))
    bp = jnp.pad(b, ((0, 0), (0, Np - N)))

    grid = (Bp // tm, Np // tn, Kp // tk)

    flops = 2 * Bp * Kp * Np
    bytes_accessed = 4 * (Bp * Kp + Kp * Np + Np + Bp * Np)

    out_padded = pl.pallas_call(
        _linear_kernel,
        out_shape=jax.ShapeDtypeStruct((Bp, Np), x.dtype),
        grid_spec=pltpu.PrefetchScalarGridSpec(
            num_scalar_prefetch=0,
            grid=grid,
            in_specs=[
                pl.BlockSpec((tm, tk), lambda i, j, k: (i, k)),
                pl.BlockSpec((tk, tn), lambda i, j, k: (k, j)),
                pl.BlockSpec((1, tn), lambda i, j, k: (0, j)),
            ],
            out_specs=pl.BlockSpec((tm, tn), lambda i, j, k: (i, j)),
            scratch_shapes=[pltpu.VMEM((tm, tn), jnp.float32)],
        ),
        compiler_params=pltpu.CompilerParams(
            dimension_semantics=("parallel", "parallel", "arbitrary"),
            vmem_limit_bytes=32 * 1024 * 1024,
        ),
        cost_estimate=pl.CostEstimate(
            flops=flops, bytes_accessed=bytes_accessed, transcendentals=0
        ),
    )(xp, wp, bp)

    # Slice the padding back off.
    return out_padded[:B, :N]


def init_lr_params(key, input_size, output_size):
    """Deterministic init mirroring torch.nn.Linear's default (U(+/- 1/sqrt(fan_in)))."""
    k_w, k_b = jax.random.split(key)
    bound = 1.0 / jnp.sqrt(jnp.float32(input_size))
    # PyTorch stores weight as (out, in); keep the transposed (in, out) copy
    # so the kernel computes x @ W^T directly.
    w = jax.random.uniform(k_w, (output_size, input_size), jnp.float32, -bound, bound)
    b = jax.random.uniform(k_b, (output_size,), jnp.float32, -bound, bound)
    return w.T, b.reshape(1, output_size)


if __name__ == "__main__":
    key = jax.random.PRNGKey(0)
    k_params, k_x = jax.random.split(key)

    batch = 2
    input_size = 32
    output_size = 16

    w_t, b = init_lr_params(k_params, input_size, output_size)
    x = jax.random.normal(k_x, (batch, input_size), jnp.float32)

    out = linear_forward(x, w_t, b)
    out = jax.block_until_ready(out)

    # Reference check against plain JAX (same math as torch's F.linear).
    ref = x @ w_t + b
    assert out.shape == (batch, output_size)
    assert jnp.allclose(out, ref, atol=1e-5, rtol=1e-5)

    print("KERNEL_OK")
</pallas_src>

<mosaic_0001>
module attributes {stable_mosaic.version = 11 : i64} {
  func.func @_linear_kernel(%arg0: i32, %arg1: i32, %arg2: i32, %arg3: memref<8x128xf32, #tpu.memory_space<vmem>>, %arg4: memref<128x128xf32, #tpu.memory_space<vmem>>, %arg5: memref<1x128xf32, #tpu.memory_space<vmem>>, %arg6: memref<8x128xf32, #tpu.memory_space<vmem>>, %arg7: memref<8x128xf32, #tpu.memory_space<vmem>>) attributes {dimension_semantics = [#tpu.dimension_semantics<parallel>, #tpu.dimension_semantics<parallel>, #tpu.dimension_semantics<arbitrary>], iteration_bounds = array<i64: 1, 1, 1>, scalar_prefetch = 0 : i64, scratch_operands = 1 : i64, tpu.core_type = #tpu.core_type<tc>, window_params = [{transform_indices = @transform_0, window_bounds = array<i64: 8, 128>}, {transform_indices = @transform_1, window_bounds = array<i64: 128, 128>}, {transform_indices = @transform_2, window_bounds = array<i64: 1, 128>}, {transform_indices = @transform_3, window_bounds = array<i64: 8, 128>}]} {
    %c0_i32 = arith.constant 0 : i32
    %0 = arith.cmpi eq, %arg2, %c0_i32 : i32
    %1 = arith.extui %0 : i1 to i32
    %c0_i32_0 = arith.constant 0 : i32
    %2 = arith.cmpi ne, %1, %c0_i32_0 : i32
    scf.if %2 {
      %cst_10 = arith.constant 0.000000e+00 : f32
      %12 = vector.broadcast %cst_10 : f32 to vector<8x128xf32>
      %c0_11 = arith.constant 0 : index
      %c0_12 = arith.constant 0 : index
      %13 = vector.load %arg7[%c0_11, %c0_12] : memref<8x128xf32, #tpu.memory_space<vmem>>, vector<8x128xf32>
      tpu.vector_store %arg7[%c0_11, %c0_12], %12 {strides = array<i32>} : memref<8x128xf32, #tpu.memory_space<vmem>>, vector<8x128xf32>,
    } else {
    }
    %c0 = arith.constant 0 : index
    %c0_1 = arith.constant 0 : index
    %3 = vector.load %arg7[%c0, %c0_1] : memref<8x128xf32, #tpu.memory_space<vmem>>, vector<8x128xf32>
    %c0_2 = arith.constant 0 : index
    %c0_3 = arith.constant 0 : index
    %4 = vector.load %arg3[%c0_2, %c0_3] : memref<8x128xf32, #tpu.memory_space<vmem>>, vector<8x128xf32>
    %c0_4 = arith.constant 0 : index
    %c0_5 = arith.constant 0 : index
    %5 = vector.load %arg4[%c0_4, %c0_5] : memref<128x128xf32, #tpu.memory_space<vmem>>, vector<128x128xf32>
    %cst = arith.constant dense<0.000000e+00> : vector<8x128xf32>
    %6 = tpu.matmul %4, %5, %cst {dimension_numbers = #tpu.dot_dimension_numbers<[1], [0], [0], [1], [0, 0, 1, 1], [], []>} : vector<8x128xf32>, vector<128x128xf32>, vector<8x128xf32> -> vector<8x128xf32>
    %7 = arith.addf %3, %6 : vector<8x128xf32>
    %c0_6 = arith.constant 0 : index
    %c0_7 = arith.constant 0 : index
    %8 = vector.load %arg7[%c0_6, %c0_7] : memref<8x128xf32, #tpu.memory_space<vmem>>, vector<8x128xf32>
    tpu.vector_store %arg7[%c0_6, %c0_7], %7 {strides = array<i32>} : memref<8x128xf32, #tpu.memory_space<vmem>>, vector<8x128xf32>,
    %c0_i32_8 = arith.constant 0 : i32
    %9 = arith.cmpi eq, %arg2, %c0_i32_8 : i32
    %10 = arith.extui %9 : i1 to i32
    %c0_i32_9 = arith.constant 0 : i32
    %11 = arith.cmpi ne, %10, %c0_i32_9 : i32
    scf.if %11 {
      %c0_10 = arith.constant 0 : index
      %c0_11 = arith.constant 0 : index
      %12 = vector.load %arg7[%c0_10, %c0_11] : memref<8x128xf32, #tpu.memory_space<vmem>>, vector<8x128xf32>
      %c0_12 = arith.constant 0 : index
      %c0_13 = arith.constant 0 : index
      %13 = vector.load %arg5[%c0_12, %c0_13] : memref<1x128xf32, #tpu.memory_space<vmem>>, vector<1x128xf32>
      %14 = vector.broadcast %13 : vector<1x128xf32> to vector<8x128xf32>
      %15 = arith.addf %12, %14 : vector<8x128xf32>
      %c0_14 = arith.constant 0 : index
      %c0_15 = arith.constant 0 : index
      %16 = vector.load %arg6[%c0_14, %c0_15] : memref<8x128xf32, #tpu.memory_space<vmem>>, vector<8x128xf32>
      tpu.vector_store %arg6[%c0_14, %c0_15], %15 {strides = array<i32>} : memref<8x128xf32, #tpu.memory_space<vmem>>, vector<8x128xf32>,
    } else {
    }
    return
  }
  func.func @transform_0(%arg0: i32, %arg1: i32, %arg2: i32) -> (i32, i32) {
    %c0_i32 = arith.constant 0 : i32
    return %arg0, %arg2 : i32, i32
  }
  func.func @transform_1(%arg0: i32, %arg1: i32, %arg2: i32) -> (i32, i32) {
    %c0_i32 = arith.constant 0 : i32
    return %arg2, %arg1 : i32, i32
  }
  func.func @transform_2(%arg0: i32, %arg1: i32, %arg2: i32) -> (i32, i32) {
    %c0_i32 = arith.constant 0 : i32
    %c0_i32_0 = arith.constant 0 : i32
    return %c0_i32, %arg1 : i32, i32
  }
  func.func @transform_3(%arg0: i32, %arg1: i32, %arg2: i32) -> (i32, i32) {
    %c0_i32 = arith.constant 0 : i32
    return %arg0, %arg1 : i32, i32
  }
}

</mosaic_0001>

<llo_original>
// kernel: linear_forward.1
$region0: #{linear_forward.1}
  #allocation0 [shape = 'u32[]', space=smem, size = 0x4, offset = 0x4, fixed_abs, tag = 'smem constant byte address 0x4 - core index']
  #allocation1 [shape = 'u32[144,128]{1,0:T(1,128)}', space=vmem, size = 0x12000, scoped, tag = 'internal scratch']
  #allocation2 [shape = 'f32[8,128]{1,0:T(8,128)}', space=vmem, size = 0x1000, scoped, tag = 'scratch operand']
  %s0 = inlined_call_operand.vmem [shape: f32[8,128], index: 0, kind: input, shape index: {}]
  %s1 = inlined_call_operand.vmem [shape: f32[128,128], index: 1, kind: input, shape index: {}]
  %s2 = inlined_call_operand.vmem [shape: f32[1,128], index: 2, kind: input, shape index: {}]
  %s3 = inlined_call_operand.vmem [shape: f32[8,128], index: 3, kind: output, shape index: {}]
  %s4 = sld [smem:[#allocation0]]
  $region30: #{linear_forward.1} parent=0
    _
  %s6 = ssub.s32 1, %s4
  %s7 = scalar_select 0, %s6, %s4
  // Predicated region
  $region2: #{linear_forward.1} parent=0 // pred_check
    _
  $region3: #{linear_forward.1} parent=0 // pred_check_branch
    %9 = sbr.rel (0) target = $region5
  $region4: #{linear_forward.1} parent=0 // pred_region
    _
  $region5: #{linear_forward.1} parent=0 // pred_fallthru
    _
  // Predicated region
  $region6: #{linear_forward.1} parent=0 // pred_check
    _
  $region7: #{linear_forward.1} parent=0 // pred_check_branch
    %11 = sbr.rel (0) target = $region9
  $region8: #{linear_forward.1} parent=0 // pred_region
    _
  $region9: #{linear_forward.1} parent=0 // pred_fallthru
    _
  // Predicated region
  $region10: #{linear_forward.1} parent=0 // pred_check
    _
  $region11: #{linear_forward.1} parent=0 // pred_check_branch
    %13 = sbr.rel (0) target = $region13
  $region12: #{linear_forward.1} parent=0 // pred_region
    _
  $region13: #{linear_forward.1} parent=0 // pred_fallthru
    _
  %p14 = scmp.eq.s32.totalorder 0, 0
  // Predicated region
  $region14: #{linear_forward.1} parent=0 // pred_check
    %p15 = pneg %p14
  $region15: #{linear_forward.1} parent=0 // pred_check_branch
    %17 = sbr.rel (%p15) target = $region17
  $region16: #{linear_forward.1} parent=0 // pred_region
    %18 = vst [vmem:[#allocation2] sm:$0xff] 0.0
  $region17: #{linear_forward.1} parent=0 // pred_fallthru
    _
  %v19 = vld [vmem:[#allocation2] sm:$0xff]
  %v20 = vld [vmem:[%s0] sm:$0xff]
  %v21 = vld [vmem:[%s1] sm:$0xff]
  %v22 = vld [vmem:[%s1 + $0x8] sm:$0xff]
  %v23 = vld [vmem:[%s1 + $0x10] sm:$0xff]
  %v24 = vld [vmem:[%s1 + $0x18] sm:$0xff]
  %v25 = vld [vmem:[%s1 + $0x20] sm:$0xff]
  %v26 = vld [vmem:[%s1 + $0x28] sm:$0xff]
  %v27 = vld [vmem:[%s1 + $0x30] sm:$0xff]
  %v28 = vld [vmem:[%s1 + $0x38] sm:$0xff]
  %v29 = vld [vmem:[%s1 + $0x40] sm:$0xff]
  %v30 = vld [vmem:[%s1 + $0x48] sm:$0xff]
  %v31 = vld [vmem:[%s1 + $0x50] sm:$0xff]
  %v32 = vld [vmem:[%s1 + $0x58] sm:$0xff]
  %v33 = vld [vmem:[%s1 + $0x60] sm:$0xff]
  %v34 = vld [vmem:[%s1 + $0x68] sm:$0xff]
  %v35 = vld [vmem:[%s1 + $0x70] sm:$0xff]
  %v36 = vld [vmem:[%s1 + $0x78] sm:$0xff]
  %37 = vmatprep.subr.mxu0 0.0
  %38 = vmatpush1.msra.mxu0 %v21
  %39 = vmatprep.subr.mxu0 0.0
  %40 = vmatpush1.msra.mxu0 %v22
  %41 = vmatprep.subr.mxu0 0.0
  %42 = vmatpush1.msra.mxu0 %v23
  %43 = vmatprep.subr.mxu0 0.0
  %44 = vmatpush1.msra.mxu0 %v24
  %45 = vmatprep.subr.mxu0 0.0
  %46 = vmatpush1.msra.mxu0 %v25
  %47 = vmatprep.subr.mxu0 0.0
  %48 = vmatpush1.msra.mxu0 %v26
  %49 = vmatprep.subr.mxu0 0.0
  %50 = vmatpush1.msra.mxu0 %v27
  %51 = vmatprep.subr.mxu0 0.0
  %52 = vmatpush1.msra.mxu0 %v28
  %53 = vmatprep.subr.mxu0 0.0
  %54 = vmatpush1.msra.mxu0 %v29
  %55 = vmatprep.subr.mxu0 0.0
  %56 = vmatpush1.msra.mxu0 %v30
  %57 = vmatprep.subr.mxu0 0.0
  %58 = vmatpush1.msra.mxu0 %v31
  %59 = vmatprep.subr.mxu0 0.0
  %60 = vmatpush1.msra.mxu0 %v32
  %61 = vmatprep.subr.mxu0 0.0
  %62 = vmatpush1.msra.mxu0 %v33
  %63 = vmatprep.subr.mxu0 0.0
  %64 = vmatpush1.msra.mxu0 %v34
  %65 = vmatprep.subr.mxu0 0.0
  %66 = vmatpush1.msra.mxu0 %v35
  %67 = vmatprep.subr.mxu0 0.0
  %68 = vmatpush1.msra.mxu0 %v36
  %69 = vmatprep.subr.mxu0 0.0
  %70 = vmatpush1.msra.mxu0 0.0
  %71 = vmatprep.subr.mxu0 0.0
  %72 = vmatpush1.msra.mxu0 0.0
  %73 = vmatprep.subr.mxu0 0.0
  %74 = vmatpush1.msra.mxu0 0.0
  %75 = vmatprep.subr.mxu0 0.0
  %76 = vmatpush1.msra.mxu0 0.0
  %77 = vmatprep.subr.mxu0 0.0
  %78 = vmatpush1.msra.mxu0 0.0
  %79 = vmatprep.subr.mxu0 0.0
  %80 = vmatpush1.msra.mxu0 0.0
  %81 = vmatprep.subr.mxu0 0.0
  %82 = vmatpush1.msra.mxu0 0.0
  %83 = vmatprep.subr.mxu0 0.0
  %84 = vmatpush1.msra.mxu0 0.0
  %85 = vmatprep.subr.mxu0 0.0
  %86 = vmatpush1.msra.mxu0 0.0
  %87 = vmatprep.subr.mxu0 0.0
  %88 = vmatpush1.msra.mxu0 0.0
  %89 = vmatprep.subr.mxu0 0.0
  %90 = vmatpush1.msra.mxu0 0.0
  %91 = vmatprep.subr.mxu0 0.0
  %92 = vmatpush1.msra.mxu0 0.0
  %93 = vmatprep.subr.mxu0 0.0
  %94 = vmatpush1.msra.mxu0 0.0
  %95 = vmatprep.subr.mxu0 0.0
  %96 = vmatpush1.msra.mxu0 0.0
  %97 = vmatprep.subr.mxu0 0.0
  %98 = vmatpush1.msra.mxu0 0.0
  %99 = vmatprep.subr.mxu0 0.0
  %100 = vmatpush1.msra.mxu0 0.0
  %101 = vmatprep.mubr.f32.mxu0 0.0
  %102 = vmatmul.mubr.f32.gmra.mrb[0].mxu0 %v20
  %v103 = vpop.f32.mrb[0].mxu0
  %v104 = vadd.f32 0.0, %v103
  %v105 = vpop.f32.mrb[0].mxu0
  %106 = vdwg.mxu0
  %v107 = vadd.f32 %v19, %v104
  %108 = vst [vmem:[#allocation2] sm:$0xff] %v107
  // Predicated region
  $region18: #{linear_forward.1} parent=0 // pred_check
    %p109 = pneg %p14
  $region19: #{linear_forward.1} parent=0 // pred_check_branch
    %111 = sbr.rel (%p109) target = $region21
  $region20: #{linear_forward.1} parent=0 // pred_region
    %v112 = vld [vmem:[#allocation2] sm:$0xff]
    %v113 = vld [vmem:[%s2] sm:$0x1]
    %v115 = vlaneseq
    %v116 = vshrl.u32 %v115, 7
    %v117 = vsub.s32 0, %v116
    %v118 = vrot.slane %v113, %v117
    %v120 = vadd.f32 %v112, %v118
    %121 = vst [vmem:[%s3] sm:$0xff] %v120
  $region21: #{linear_forward.1} parent=0 // pred_fallthru
    _
  // Predicated region
  $region22: #{linear_forward.1} parent=0 // pred_check
    _
  $region23: #{linear_forward.1} parent=0 // pred_check_branch
    %123 = sbr.rel (0) target = $region25
  $region24: #{linear_forward.1} parent=0 // pred_region
    _
  $region25: #{linear_forward.1} parent=0 // pred_fallthru
    _
  // Predicated region
  $region26: #{linear_forward.1} parent=0 // pred_check
    _
  $region27: #{linear_forward.1} parent=0 // pred_check_branch
    %125 = sbr.rel (0) target = $region29
  $region28: #{linear_forward.1} parent=0 // pred_region
    _
  $region29: #{linear_forward.1} parent=0 // pred_fallthru
    _

</llo_original>
